<compile_context>
chip_gen: v6e
topology: v6e:2x2x1
jax: 0.10.0
libtpu: 0.0.40
codegen_flags: <defaults>
</compile_context>

<pallas_src>
import math

import jax
import jax.numpy as jnp
from jax.experimental import pallas as pl
from jax.experimental.pallas import tpu as pltpu

INV_PI = 0.31830988618
HIDDEN = 32
OUT_RAW = 5        # reference MLP head width: [mean0, mean1, sigma_raw, unused, weight_raw]
OUT_PAD = 8        # packed / transposed head rows (only rows 0..4 carry data)
_LANE = 128


def _round_up(x, m):
    return ((x + m - 1) // m) * m


def _leaky_relu(x, slope=0.01):
    return jnp.where(x > 0, x, slope * x)


def _wsd_kernel(zt_ref, cond_ref, w1_ref, b1_ref, w2_ref, b2_ref,
                head_ref, b3t_ref, out_ref):
    # --- learn_prior: MLP [C, 32, 32, 5] with LeakyReLU(0.01) ---
    # Hidden layers in standard (rows = batch) orientation: MXU-friendly and the
    # bias adds broadcast over sublanes (cheap).
    x = cond_ref[...]                                                # (TN, C)
    h1 = _leaky_relu(jnp.dot(x, w1_ref[...],
                             preferred_element_type=jnp.float32) + b1_ref[...])
    h2 = _leaky_relu(jnp.dot(h1.astype(w2_ref.dtype), w2_ref[...],
                             preferred_element_type=jnp.float32) + b2_ref[...])

    # Final layer fused with the output transpose: contract both operands on
    # their minor dim ("q @ k^T" pattern) so the MXU emits ht = w3^T @ h2^T
    # directly as a lane-dense (8, TN) slab.
    # rows: [mean0, mean1, sigma_raw, unused, weight_raw, 0, 0, 0]
    dn = (((1,), (1,)), ((), ()))
    ht = jax.lax.dot_general(head_ref[...], h2.astype(head_ref.dtype), dn,
                             preferred_element_type=jnp.float32) + b3t_ref[...]

    mean0 = ht[0:1, :]                                               # (1, TN)
    mean1 = ht[1:2, :]
    log_scale = jax.nn.softplus(ht[2:3, :])       # sigma = softplus(h[:, 2::4])
    weight = jax.nn.sigmoid(ht[4:5, :])           # sigmoid(h[:, 4])

    # --- DiagGaussianCond(2).prob(z, mean, sigma) ---
    # z arrives pre-transposed (2, TN) and exact (never touches the MXU).
    zt = zt_ref[...]
    z0 = zt[0:1, :]
    z1 = zt[1:2, :]
    inv_scale = jnp.exp(-log_scale)               # EUP; multiply, not divide
    d0 = (z0 - mean0) * inv_scale
    d1 = (z1 - mean1) * inv_scale
    gauss_logp = (-math.log(2.0 * math.pi)
                  - (2.0 * log_scale + 0.5 * (d0 * d0 + d1 * d1)))
    gauss_p = jnp.exp(gauss_logp)                                    # (1, TN)

    # --- LambertianLobe.prob(z) ---
    r2 = z0 * z0 + z1 * z1
    lambert_p = jnp.where(r2 > 1.0, 0.0, INV_PI)

    # --- mixture + log ---
    p = gauss_p * weight + lambert_p * (1.0 - weight) + 1e-5
    logp = jnp.log(p)

    # Pack rows [mean0, mean1, sigma, weight, logp, 0, 0, 0] into the (8, TN)
    # output block: one sublane-iota select over lane-dense rows, one full
    # unmasked store stream per grid step.
    row = jax.lax.broadcasted_iota(jnp.int32, ht.shape, 0)           # (8, TN)
    packed = (jnp.where(row < 2, ht, 0.0)                            # mean rows
              + jnp.where(row == 2, log_scale, 0.0)
              + jnp.where(row == 3, weight, 0.0)
              + jnp.where(row == 4, logp, 0.0))
    out_ref[...] = packed


def weighted_sum_log_prob(z, cond_vec, params, *, tile_n=8192):
    """Fused learn_prior + log_prob. Returns (mean, sigma, weight, log_p)."""
    N, C = cond_vec.shape
    assert z.shape == (N, 2)
    w1, b1, w2, b2, w3, b3 = params
    H = w1.shape[1]
    assert w3.shape == (H, OUT_RAW) and b3.shape == (1, OUT_RAW)

    f32 = jnp.float32
    # Transposed head: ht = head @ h2^T + b3t (rows 0..4 = final-layer outputs).
    head = jnp.zeros((OUT_PAD, H), f32).at[:OUT_RAW, :].set(w3.T.astype(f32))
    b3t = jnp.zeros((OUT_PAD, 1), f32).at[:OUT_RAW, 0].set(b3.reshape(-1).astype(f32))

    # bf16 fast path: consume a bf16 cond_vec as-is (halves the dominant HBM
    # read); cast the tiny weights once so the MXU runs single-pass bf16.
    if cond_vec.dtype == jnp.bfloat16:
        w1 = w1.astype(jnp.bfloat16)
        w2 = w2.astype(jnp.bfloat16)
        head = head.astype(jnp.bfloat16)
    else:
        w1 = w1.astype(f32)
        w2 = w2.astype(f32)
    b1 = b1.astype(f32)
    b2 = b2.astype(f32)

    # z pre-transposed (2, N): keeps the epilogue lane-dense and z exact without
    # any in-kernel vector transpose; the extra wrapper pass is only over z's
    # two columns (~8 B/row), a few percent of the cond read.
    z_t = z.astype(f32).T

    # ---- tile sizing ----
    n_aligned = _round_up(N, _LANE)
    tile = _round_up(max(int(tile_n), _LANE), _LANE)
    tile = min(tile, n_aligned)
    # v7x: keep >= 2 grid steps where possible so ("parallel",) shards the grid
    # across both TensorCores instead of leaving one idle.
    if n_aligned >= 2 * _LANE:
        tile = min(tile, _round_up(-(-n_aligned // 2), _LANE))
    # VMEM cap: keep the double-buffered working set around ~12 MiB so it fits
    # every generation's default scoped-VMEM budget (v5e: 16 MiB).
    bytes_per_row = (2 * C * cond_vec.dtype.itemsize   # cond tile (x2 buffers)
                     + 2 * 2 * 4                       # z^T tile (x2 buffers)
                     + 2 * H * 4                       # h1 + h2 intermediates
                     + 2 * OUT_PAD * 4)                # packed output (x2 buffers)
    budget = 12 * 1024 * 1024
    tile = min(tile, max(_LANE, (budget // bytes_per_row) // _LANE * _LANE))

    n_pad = _round_up(N, tile)
    if n_pad != N:
        cond_vec = jnp.pad(cond_vec, ((0, n_pad - N), (0, 0)))
        z_t = jnp.pad(z_t, ((0, 0), (0, n_pad - N)))
    grid = (n_pad // tile,)

    packed = pl.pallas_call(
        _wsd_kernel,
        grid=grid,
        in_specs=[
            pl.BlockSpec((2, tile), lambda i: (0, i)),         # z^T
            pl.BlockSpec((tile, C), lambda i: (i, 0)),         # cond_vec
            pl.BlockSpec((C, H), lambda i: (0, 0)),            # w1
            pl.BlockSpec((1, H), lambda i: (0, 0)),            # b1
            pl.BlockSpec((H, H), lambda i: (0, 0)),            # w2
            pl.BlockSpec((1, H), lambda i: (0, 0)),            # b2
            pl.BlockSpec((OUT_PAD, H), lambda i: (0, 0)),      # head (w3^T, padded)
            pl.BlockSpec((OUT_PAD, 1), lambda i: (0, 0)),      # b3^T (padded)
        ],
        out_specs=pl.BlockSpec((OUT_PAD, tile), lambda i: (0, i)),
        out_shape=jax.ShapeDtypeStruct((OUT_PAD, n_pad), jnp.float32),
        compiler_params=pltpu.CompilerParams(
            dimension_semantics=("parallel",)),
    )(z_t, cond_vec, w1, b1, w2, b2, head, b3t)

    packed = packed[:, :N]
    mean = packed[0:2, :].T       # (N, 2)
    sigma = packed[2:3, :].T      # (N, 1)
    weight = packed[3:4, :].T     # (N, 1)
    log_p = packed[4:5, :].T      # (N, 1)
    return mean, sigma, weight, log_p


def init_params(key, cond_C, hidden=HIDDEN):
    """Deterministic synthetic init of MLP([cond_C, 32, 32, 5]); weights stored (in, out)."""
    k1, k2, k3, k4, k5, k6 = jax.random.split(key, 6)
    w1 = jax.random.normal(k1, (cond_C, hidden), jnp.float32) / jnp.sqrt(float(cond_C))
    b1 = jax.random.normal(k2, (1, hidden), jnp.float32) * 0.01
    w2 = jax.random.normal(k3, (hidden, hidden), jnp.float32) / jnp.sqrt(float(hidden))
    b2 = jax.random.normal(k4, (1, hidden), jnp.float32) * 0.01
    w3 = jax.random.normal(k5, (hidden, OUT_RAW), jnp.float32) / jnp.sqrt(float(hidden))
    b3 = jax.random.normal(k6, (1, OUT_RAW), jnp.float32) * 0.01
    return (w1, b1, w2, b2, w3, b3)


def reference_log_prob(z, cond_vec, params, compute_dtype=jnp.float32):
    """Pure-JAX reference mirroring the PyTorch semantics (and the kernel's cast points)."""
    w1, b1, w2, b2, w3, b3 = params
    cd = compute_dtype
    f32 = jnp.float32
    h1 = _leaky_relu(jnp.dot(cond_vec.astype(cd), w1.astype(cd),
                             preferred_element_type=f32) + b1)
    h2 = _leaky_relu(jnp.dot(h1.astype(cd), w2.astype(cd),
                             preferred_element_type=f32) + b2)
    h = jnp.dot(h2.astype(cd), w3.astype(cd), preferred_element_type=f32) + b3
    mean = h[:, 0:2]
    sigma = jax.nn.softplus(h[:, 2:3])
    weight = jax.nn.sigmoid(h[:, 4:5])
    z = z.astype(f32)
    inner = sigma + 0.5 * jnp.square((z - mean) / jnp.exp(sigma))
    gauss_p = jnp.exp(-math.log(2.0 * math.pi)
                      - jnp.sum(inner, axis=1, keepdims=True))
    lambert_p = jnp.where(jnp.sum(jnp.square(z), axis=1, keepdims=True) > 1.0,
                          0.0, INV_PI)
    return jnp.log(gauss_p * weight + lambert_p * (1.0 - weight) + 1e-5)


if __name__ == "__main__":
    key = jax.random.PRNGKey(0)

    # --- main check (small shapes; two-TC clamp gives a 2-step grid) ---
    N, C = 256, 16
    kc, kz, kp = jax.random.split(key, 3)
    cond_vec = jax.random.normal(kc, (N, C), jnp.float32)
    z = jax.random.normal(kz, (N, 2), jnp.float32) * 0.6
    params = init_params(kp, C)

    mean, sigma, weight, log_p = weighted_sum_log_prob(z, cond_vec, params)
    jax.block_until_ready(log_p)
    assert mean.shape == (N, 2) and sigma.shape == (N, 1)
    assert weight.shape == (N, 1) and log_p.shape == (N, 1)

    ref = reference_log_prob(z, cond_vec, params)
    assert jnp.allclose(log_p, ref, atol=5e-2, rtol=5e-2), (
        float(jnp.max(jnp.abs(log_p - ref))))

    # --- ragged-N / multi-step grid check (exercises padding path) ---
    N2 = 200
    kc2, kz2 = jax.random.split(kc)
    cond_vec2 = jax.random.normal(kc2, (N2, C), jnp.float32)
    z2 = jax.random.normal(kz2, (N2, 2), jnp.float32) * 0.6
    _, _, _, log_p2 = weighted_sum_log_prob(z2, cond_vec2, params, tile_n=128)
    jax.block_until_ready(log_p2)
    ref2 = reference_log_prob(z2, cond_vec2, params)
    assert log_p2.shape == (N2, 1)
    assert jnp.allclose(log_p2, ref2, atol=5e-2, rtol=5e-2), (
        float(jnp.max(jnp.abs(log_p2 - ref2))))

    # --- bf16 cond_vec fast path (compared against a matched-quantization ref) ---
    cond_bf16 = cond_vec.astype(jnp.bfloat16)
    _, _, _, log_p3 = weighted_sum_log_prob(z, cond_bf16, params)
    jax.block_until_ready(log_p3)
    ref3 = reference_log_prob(z, cond_bf16, params, compute_dtype=jnp.bfloat16)
    assert jnp.allclose(log_p3, ref3, atol=5e-2, rtol=5e-2), (
        float(jnp.max(jnp.abs(log_p3 - ref3))))

    print("KERNEL_OK")
</pallas_src>

<mosaic_0001>
module attributes {stable_mosaic.version = 11 : i64} {
  func.func @_wsd_kernel(%arg0: i32, %arg1: memref<2x128xf32, #tpu.memory_space<vmem>>, %arg2: memref<128x16xf32, #tpu.memory_space<vmem>>, %arg3: memref<16x32xf32, #tpu.memory_space<vmem>>, %arg4: memref<1x32xf32, #tpu.memory_space<vmem>>, %arg5: memref<32x32xf32, #tpu.memory_space<vmem>>, %arg6: memref<1x32xf32, #tpu.memory_space<vmem>>, %arg7: memref<8x32xf32, #tpu.memory_space<vmem>>, %arg8: memref<8x1xf32, #tpu.memory_space<vmem>>, %arg9: memref<8x128xf32, #tpu.memory_space<vmem>>) attributes {dimension_semantics = [#tpu.dimension_semantics<parallel>], iteration_bounds = array<i64: 2>, scalar_prefetch = 0 : i64, scratch_operands = 0 : i64, tpu.core_type = #tpu.core_type<tc>, window_params = [{transform_indices = @transform_0, window_bounds = array<i64: 2, 128>}, {transform_indices = @transform_1, window_bounds = array<i64: 128, 16>}, {pipeline_mode = #tpu.pipeline_mode<synchronous>, transform_indices = @transform_2, window_bounds = array<i64: 16, 32>}, {pipeline_mode = #tpu.pipeline_mode<synchronous>, transform_indices = @transform_3, window_bounds = array<i64: 1, 32>}, {pipeline_mode = #tpu.pipeline_mode<synchronous>, transform_indices = @transform_4, window_bounds = array<i64: 32, 32>}, {pipeline_mode = #tpu.pipeline_mode<synchronous>, transform_indices = @transform_5, window_bounds = array<i64: 1, 32>}, {pipeline_mode = #tpu.pipeline_mode<synchronous>, transform_indices = @transform_6, window_bounds = array<i64: 8, 32>}, {pipeline_mode = #tpu.pipeline_mode<synchronous>, transform_indices = @transform_7, window_bounds = array<i64: 8, 1>}, {transform_indices = @transform_8, window_bounds = array<i64: 8, 128>}]} {
    %c0 = arith.constant 0 : index
    %c0_0 = arith.constant 0 : index
    %0 = vector.load %arg2[%c0, %c0_0] : memref<128x16xf32, #tpu.memory_space<vmem>>, vector<128x16xf32>
    %c0_1 = arith.constant 0 : index
    %c0_2 = arith.constant 0 : index
    %1 = vector.load %arg3[%c0_1, %c0_2] : memref<16x32xf32, #tpu.memory_space<vmem>>, vector<16x32xf32>
    %cst = arith.constant dense<0.000000e+00> : vector<128x32xf32>
    %2 = tpu.matmul %0, %1, %cst {dimension_numbers = #tpu.dot_dimension_numbers<[1], [0], [0], [1], [0, 0, 1, 1], [], []>} : vector<128x16xf32>, vector<16x32xf32>, vector<128x32xf32> -> vector<128x32xf32>
    %c0_3 = arith.constant 0 : index
    %c0_4 = arith.constant 0 : index
    %3 = vector.load %arg4[%c0_3, %c0_4] : memref<1x32xf32, #tpu.memory_space<vmem>>, vector<1x32xf32>
    %4 = vector.broadcast %3 : vector<1x32xf32> to vector<128x32xf32>
    %5 = arith.addf %2, %4 : vector<128x32xf32>
    %cst_5 = arith.constant 0.000000e+00 : f32
    %6 = vector.broadcast %cst_5 : f32 to vector<128x32xf32>
    %7 = arith.cmpf ogt, %5, %6 : vector<128x32xf32>
    %cst_6 = arith.constant 0.00999999977 : f32
    %8 = vector.broadcast %cst_6 : f32 to vector<128x32xf32>
    %9 = arith.mulf %8, %5 : vector<128x32xf32>
    %10 = arith.select %7, %5, %9 : vector<128x32xi1>, vector<128x32xf32>
    %c0_7 = arith.constant 0 : index
    %c0_8 = arith.constant 0 : index
    %11 = vector.load %arg5[%c0_7, %c0_8] : memref<32x32xf32, #tpu.memory_space<vmem>>, vector<32x32xf32>
    %cst_9 = arith.constant dense<0.000000e+00> : vector<128x32xf32>
    %12 = tpu.matmul %10, %11, %cst_9 {dimension_numbers = #tpu.dot_dimension_numbers<[1], [0], [0], [1], [0, 0, 1, 1], [], []>} : vector<128x32xf32>, vector<32x32xf32>, vector<128x32xf32> -> vector<128x32xf32>
    %c0_10 = arith.constant 0 : index
    %c0_11 = arith.constant 0 : index
    %13 = vector.load %arg6[%c0_10, %c0_11] : memref<1x32xf32, #tpu.memory_space<vmem>>, vector<1x32xf32>
    %14 = vector.broadcast %13 : vector<1x32xf32> to vector<128x32xf32>
    %15 = arith.addf %12, %14 : vector<128x32xf32>
    %cst_12 = arith.constant 0.000000e+00 : f32
    %16 = vector.broadcast %cst_12 : f32 to vector<128x32xf32>
    %17 = arith.cmpf ogt, %15, %16 : vector<128x32xf32>
    %cst_13 = arith.constant 0.00999999977 : f32
    %18 = vector.broadcast %cst_13 : f32 to vector<128x32xf32>
    %19 = arith.mulf %18, %15 : vector<128x32xf32>
    %20 = arith.select %17, %15, %19 : vector<128x32xi1>, vector<128x32xf32>
    %c0_14 = arith.constant 0 : index
    %c0_15 = arith.constant 0 : index
    %21 = vector.load %arg7[%c0_14, %c0_15] : memref<8x32xf32, #tpu.memory_space<vmem>>, vector<8x32xf32>
    %cst_16 = arith.constant dense<0.000000e+00> : vector<8x128xf32>
    %22 = tpu.matmul %21, %20, %cst_16 {dimension_numbers = #tpu.dot_dimension_numbers<[1], [1], [0], [0], [0, 0, 1, 0], [], []>} : vector<8x32xf32>, vector<128x32xf32>, vector<8x128xf32> -> vector<8x128xf32>
    %c0_17 = arith.constant 0 : index
    %c0_18 = arith.constant 0 : index
    %23 = vector.load %arg8[%c0_17, %c0_18] : memref<8x1xf32, #tpu.memory_space<vmem>>, vector<8x1xf32>
    %24 = vector.broadcast %23 : vector<8x1xf32> to vector<8x128xf32>
    %25 = arith.addf %22, %24 : vector<8x128xf32>
    %26 = vector.extract_strided_slice %25 {offsets = [0, 0], sizes = [1, 128], strides = [1, 1]} : vector<8x128xf32> to vector<1x128xf32>
    %27 = vector.extract_strided_slice %25 {offsets = [1, 0], sizes = [1, 128], strides = [1, 1]} : vector<8x128xf32> to vector<1x128xf32>
    %28 = vector.extract_strided_slice %25 {offsets = [2, 0], sizes = [1, 128], strides = [1, 1]} : vector<8x128xf32> to vector<1x128xf32>
    %cst_19 = arith.constant 0.000000e+00 : f32
    %29 = vector.broadcast %cst_19 : f32 to vector<1x128xf32>
    %30 = arith.maximumf %28, %29 : vector<1x128xf32>
    %31 = vector.broadcast %cst_19 : f32 to vector<1x128xf32>
    %32 = arith.subf %28, %31 : vector<1x128xf32>
    %33 = arith.cmpf one, %32, %32 : vector<1x128xf32>
    %34 = vector.broadcast %cst_19 : f32 to vector<1x128xf32>
    %35 = arith.addf %28, %34 : vector<1x128xf32>
    %36 = math.absf %32 : vector<1x128xf32>
    %cst_20 = arith.constant 0.000000e+00 : f32
    %37 = vector.broadcast %cst_20 : f32 to vector<1x128xf32>
    %38 = arith.subf %37, %36 : vector<1x128xf32>
    %39 = math.exp %38 : vector<1x128xf32>
    %40 = math.log1p %39 : vector<1x128xf32>
    %41 = arith.addf %30, %40 : vector<1x128xf32>
    %42 = arith.select %33, %35, %41 : vector<1x128xi1>, vector<1x128xf32>
    %43 = vector.extract_strided_slice %25 {offsets = [4, 0], sizes = [1, 128], strides = [1, 1]} : vector<8x128xf32> to vector<1x128xf32>
    %44 = arith.negf %43 : vector<1x128xf32>
    %45 = math.exp %44 : vector<1x128xf32>
    %cst_21 = arith.constant 1.000000e+00 : f32
    %46 = vector.broadcast %cst_21 : f32 to vector<1x128xf32>
    %47 = arith.addf %46, %45 : vector<1x128xf32>
    %48 = arith.divf %46, %47 : vector<1x128xf32>
    %c0_22 = arith.constant 0 : index
    %c0_23 = arith.constant 0 : index
    %49 = vector.load %arg1[%c0_22, %c0_23] : memref<2x128xf32, #tpu.memory_space<vmem>>, vector<2x128xf32>
    %50 = vector.extract_strided_slice %49 {offsets = [0, 0], sizes = [1, 128], strides = [1, 1]} : vector<2x128xf32> to vector<1x128xf32>
    %51 = vector.extract_strided_slice %49 {offsets = [1, 0], sizes = [1, 128], strides = [1, 1]} : vector<2x128xf32> to vector<1x128xf32>
    %cst_24 = arith.constant 0.000000e+00 : f32
    %52 = vector.broadcast %cst_24 : f32 to vector<1x128xf32>
    %53 = arith.subf %52, %42 : vector<1x128xf32>
    %54 = math.exp %53 : vector<1x128xf32>
    %55 = arith.subf %50, %26 : vector<1x128xf32>
    %56 = arith.mulf %55, %54 : vector<1x128xf32>
    %57 = arith.subf %51, %27 : vector<1x128xf32>
    %58 = arith.mulf %57, %54 : vector<1x128xf32>
    %cst_25 = arith.constant 2.000000e+00 : f32
    %59 = vector.broadcast %cst_25 : f32 to vector<1x128xf32>
    %60 = arith.mulf %59, %42 : vector<1x128xf32>
    %61 = arith.mulf %56, %56 : vector<1x128xf32>
    %62 = arith.mulf %58, %58 : vector<1x128xf32>
    %63 = arith.addf %61, %62 : vector<1x128xf32>
    %cst_26 = arith.constant 5.000000e-01 : f32
    %64 = vector.broadcast %cst_26 : f32 to vector<1x128xf32>
    %65 = arith.mulf %64, %63 : vector<1x128xf32>
    %66 = arith.addf %60, %65 : vector<1x128xf32>
    %cst_27 = arith.constant -1.83787704 : f32
    %67 = vector.broadcast %cst_27 : f32 to vector<1x128xf32>
    %68 = arith.subf %67, %66 : vector<1x128xf32>
    %69 = math.exp %68 : vector<1x128xf32>
    %70 = arith.mulf %50, %50 : vector<1x128xf32>
    %71 = arith.mulf %51, %51 : vector<1x128xf32>
    %72 = arith.addf %70, %71 : vector<1x128xf32>
    %cst_28 = arith.constant 1.000000e+00 : f32
    %73 = vector.broadcast %cst_28 : f32 to vector<1x128xf32>
    %74 = arith.cmpf ogt, %72, %73 : vector<1x128xf32>
    %cst_29 = arith.constant 0.000000e+00 : f32
    %cst_30 = arith.constant 0.318309873 : f32
    %75 = vector.broadcast %cst_29 : f32 to vector<1x128xf32>
    %76 = vector.broadcast %cst_30 : f32 to vector<1x128xf32>
    %77 = arith.select %74, %75, %76 : vector<1x128xi1>, vector<1x128xf32>
    %78 = arith.mulf %69, %48 : vector<1x128xf32>
    %cst_31 = arith.constant 1.000000e+00 : f32
    %79 = vector.broadcast %cst_31 : f32 to vector<1x128xf32>
    %80 = arith.subf %79, %48 : vector<1x128xf32>
    %81 = arith.mulf %77, %80 : vector<1x128xf32>
    %82 = arith.addf %78, %81 : vector<1x128xf32>
    %cst_32 = arith.constant 9.99999974E-6 : f32
    %83 = vector.broadcast %cst_32 : f32 to vector<1x128xf32>
    %84 = arith.addf %82, %83 : vector<1x128xf32>
    %85 = math.log %84 : vector<1x128xf32>
    %86 = tpu.iota {dimensions = array<i32: 0>} : vector<8x128xi32>
    %c2_i32 = arith.constant 2 : i32
    %87 = vector.broadcast %c2_i32 : i32 to vector<8x128xi32>
    %88 = arith.cmpi slt, %86, %87 : vector<8x128xi32>
    %cst_33 = arith.constant 0.000000e+00 : f32
    %89 = vector.broadcast %cst_33 : f32 to vector<8x128xf32>
    %90 = arith.select %88, %25, %89 : vector<8x128xi1>, vector<8x128xf32>
    %c2_i32_34 = arith.constant 2 : i32
    %91 = vector.broadcast %c2_i32_34 : i32 to vector<8x128xi32>
    %92 = arith.cmpi eq, %86, %91 : vector<8x128xi32>
    %cst_35 = arith.constant 0.000000e+00 : f32
    %93 = vector.shape_cast %42 : vector<1x128xf32> to vector<1x128xf32>
    %94 = vector.broadcast %93 : vector<1x128xf32> to vector<8x128xf32>
    %95 = vector.broadcast %cst_35 : f32 to vector<8x128xf32>
    %96 = arith.select %92, %94, %95 : vector<8x128xi1>, vector<8x128xf32>
    %97 = arith.addf %90, %96 : vector<8x128xf32>
    %c3_i32 = arith.constant 3 : i32
    %98 = vector.broadcast %c3_i32 : i32 to vector<8x128xi32>
    %99 = arith.cmpi eq, %86, %98 : vector<8x128xi32>
    %cst_36 = arith.constant 0.000000e+00 : f32
    %100 = vector.shape_cast %48 : vector<1x128xf32> to vector<1x128xf32>
    %101 = vector.broadcast %100 : vector<1x128xf32> to vector<8x128xf32>
    %102 = vector.broadcast %cst_36 : f32 to vector<8x128xf32>
    %103 = arith.select %99, %101, %102 : vector<8x128xi1>, vector<8x128xf32>
    %104 = arith.addf %97, %103 : vector<8x128xf32>
    %c4_i32 = arith.constant 4 : i32
    %105 = vector.broadcast %c4_i32 : i32 to vector<8x128xi32>
    %106 = arith.cmpi eq, %86, %105 : vector<8x128xi32>
    %cst_37 = arith.constant 0.000000e+00 : f32
    %107 = vector.shape_cast %85 : vector<1x128xf32> to vector<1x128xf32>
    %108 = vector.broadcast %107 : vector<1x128xf32> to vector<8x128xf32>
    %109 = vector.broadcast %cst_37 : f32 to vector<8x128xf32>
    %110 = arith.select %106, %108, %109 : vector<8x128xi1>, vector<8x128xf32>
    %111 = arith.addf %104, %110 : vector<8x128xf32>
    %c0_38 = arith.constant 0 : index
    %c0_39 = arith.constant 0 : index
    %112 = vector.load %arg9[%c0_38, %c0_39] : memref<8x128xf32, #tpu.memory_space<vmem>>, vector<8x128xf32>
    tpu.vector_store %arg9[%c0_38, %c0_39], %111 {strides = array<i32>} : memref<8x128xf32, #tpu.memory_space<vmem>>, vector<8x128xf32>,
    return
  }
  func.func @transform_0(%arg0: i32) -> (i32, i32) {
    %c0_i32 = arith.constant 0 : i32
    %c0_i32_0 = arith.constant 0 : i32
    return %c0_i32, %arg0 : i32, i32
  }
  func.func @transform_1(%arg0: i32) -> (i32, i32) {
    %c0_i32 = arith.constant 0 : i32
    %c0_i32_0 = arith.constant 0 : i32
    return %arg0, %c0_i32 : i32, i32
  }
  func.func @transform_2(%arg0: i32) -> (i32, i32) {
    %c0_i32 = arith.constant 0 : i32
    %c0_i32_0 = arith.constant 0 : i32
    %c0_i32_1 = arith.constant 0 : i32
    return %c0_i32, %c0_i32_0 : i32, i32
  }
  func.func @transform_3(%arg0: i32) -> (i32, i32) {
    %c0_i32 = arith.constant 0 : i32
    %c0_i32_0 = arith.constant 0 : i32
    %c0_i32_1 = arith.constant 0 : i32
    return %c0_i32, %c0_i32_0 : i32, i32
  }
  func.func @transform_4(%arg0: i32) -> (i32, i32) {
    %c0_i32 = arith.constant 0 : i32
    %c0_i32_0 = arith.constant 0 : i32
    %c0_i32_1 = arith.constant 0 : i32
    return %c0_i32, %c0_i32_0 : i32, i32
  }
  func.func @transform_5(%arg0: i32) -> (i32, i32) {
    %c0_i32 = arith.constant 0 : i32
    %c0_i32_0 = arith.constant 0 : i32
    %c0_i32_1 = arith.constant 0 : i32
    return %c0_i32, %c0_i32_0 : i32, i32
  }
  func.func @transform_6(%arg0: i32) -> (i32, i32) {
    %c0_i32 = arith.constant 0 : i32
    %c0_i32_0 = arith.constant 0 : i32
    %c0_i32_1 = arith.constant 0 : i32
    return %c0_i32, %c0_i32_0 : i32, i32
  }
  func.func @transform_7(%arg0: i32) -> (i32, i32) {
    %c0_i32 = arith.constant 0 : i32
    %c0_i32_0 = arith.constant 0 : i32
    %c0_i32_1 = arith.constant 0 : i32
    return %c0_i32, %c0_i32_0 : i32, i32
  }
  func.func @transform_8(%arg0: i32) -> (i32, i32) {
    %c0_i32 = arith.constant 0 : i32
    %c0_i32_0 = arith.constant 0 : i32
    return %c0_i32, %arg0 : i32, i32
  }
}

</mosaic_0001>

<llo_original>
// kernel: tpu_custom_call.1
$region0: #{tpu_custom_call.1}
  #allocation0 [shape = 'u32[]', space=smem, size = 0x4, offset = 0x4, fixed_abs, tag = 'smem constant byte address 0x4 - core index']
  #allocation1 [shape = 'u32[144,128]{1,0:T(1,128)}', space=vmem, size = 0x12000, scoped, tag = 'internal scratch']
  %s0 = inlined_call_operand.vmem [shape: f32[2,256], index: 0, kind: input, shape index: {}]
  %s1 = inlined_call_operand.vmem [shape: f32[256,16], index: 1, kind: input, shape index: {}]
  %s2 = inlined_call_operand.vmem [shape: f32[16,32], index: 2, kind: input, shape index: {}]
  %s3 = inlined_call_operand.vmem [shape: f32[1,32], index: 3, kind: input, shape index: {}]
  %s4 = inlined_call_operand.vmem [shape: f32[32,32], index: 4, kind: input, shape index: {}]
  %s5 = inlined_call_operand.vmem [shape: f32[1,32], index: 5, kind: input, shape index: {}]
  %s6 = inlined_call_operand.vmem [shape: f32[8,32], index: 6, kind: input, shape index: {}]
  %s7 = inlined_call_operand.vmem [shape: f32[8,1], index: 7, kind: input, shape index: {}]
  %s8 = inlined_call_operand.hbm [shape: f32[8,256], index: 8, kind: output, shape index: {}]
  %s9 = sld [smem:[#allocation0]]
  $region65: #{tpu_custom_call.1} parent=0
    _
  %s11 = ssub.s32 1, %s9
  %s12 = scalar_select 0, %s11, %s9
  $region1: #{tpu_custom_call.1} parent=0
    #allocation2 [shape = 'u8[8192]{0}', space=vmem, size = 0x2000, scoped, tag = 'output window, operand 0']
    #allocation3 [shape = 's32[2]{0}', space=sflag, size = 0x8, scoped, tag = 'scoped memory for tpu_custom_call.1']
    %13 = vsyncpa [#allocation3], 0
    %s14 = scalar_lea.sflag [#allocation3], 1
    %15 = vsyncpa %s14, 0
    loop: start=0, step=1, limit=4
    $region2: #{tpu_custom_call.1} parent=1 // loop_pre_header
      _
    $region3: #{tpu_custom_call.1} parent=1 // loop_header
      %s17 = sphi 0, %s21
      %p18 = scmp.ge.s32.totalorder %s17, 4
      %s27 = sphi 0, %s29
      %s30 = sphi 0, %s27
      %s31 = sphi 0, %s30
      %s47 = sphi 0, %s31
      %s53 = sphi 0, %s55
      %s56 = sphi 0, %s53
      %s57 = sphi 0, %s56
      %s73 = sphi 0, %s57
      %s77 = sphi 0, %s77
      %s79 = sphi 0, %s77
      %s80 = sphi 0, %s79
      %s94 = sphi 0, %s80
      %s98 = sphi 0, %s98
      %s100 = sphi 0, %s98
      %s101 = sphi 0, %s100
      %s115 = sphi 0, %s101
      %s119 = sphi 0, %s119
      %s121 = sphi 0, %s119
      %s122 = sphi 0, %s121
      %s136 = sphi 0, %s122
      %s140 = sphi 0, %s140
      %s142 = sphi 0, %s140
      %s143 = sphi 0, %s142
      %s157 = sphi 0, %s143
      %s161 = sphi 0, %s161
      %s163 = sphi 0, %s161
      %s164 = sphi 0, %s163
      %s178 = sphi 0, %s164
      %s182 = sphi 0, %s182
      %s184 = sphi 0, %s182
      %s185 = sphi 0, %s184
      %s199 = sphi 0, %s185
      %s205 = sphi 0, %s207
      %s208 = sphi 0, %s205
      %s209 = sphi 0, %s208
      %s225 = sphi 0, %s209
    $region4: #{tpu_custom_call.1} parent=1 // loop_header_branch
      %20 = sbr.rel (%p18) target = $region8
    $region5: #{tpu_custom_call.1} parent=1 // loop_body
      %s22 = ssub.s32 %s17, 1
      %s23 = ssub.s32 %s17, 2
      %s24 = sadd.s32 %s17, 1
      %s25 = ssub.s32 %s17, %s24
      %p26 = scmp.eq.s32.totalorder %s25, 0
      %s28 = sadd.s32 %s27, 1
      %s29 = scalar_select %p26, %s27, %s28
      %p32 = pneg %p26
      %p33 = scmp.eq.s32.totalorder %s17, 1
      %p34 = por %p32, %p33
      %p35 = scmp.ne.s32.totalorder %s27, %s30
      %p36 = scmp.eq.s32.totalorder %s17, 0
      %p37 = por %p35, %p36
      %p38 = scmp.ne.s32.totalorder %s27, %s30
      %p39 = scmp.eq.s32.totalorder %s22, 1
      %p40 = por %p38, %p39
      %p41 = scmp.ne.s32.totalorder %s30, %s31
      %p42 = scmp.eq.s32.totalorder %s22, 0
      %p43 = por %p41, %p42
      %p44 = scmp.ne.s32.totalorder %s30, %s31
      %p45 = scmp.eq.s32.totalorder %s23, 1
      %p46 = por %p44, %p45
      %p48 = scmp.ne.s32.totalorder %s31, %s47
      %p49 = scmp.eq.s32.totalorder %s23, 0
      %p50 = por %p48, %p49
      %s51 = ssub.s32 %s17, %s24
      %p52 = scmp.eq.s32.totalorder %s51, 0
      %s54 = sadd.s32 %s53, 1
      %s55 = scalar_select %p52, %s53, %s54
      %p58 = pneg %p52
      %p59 = scmp.eq.s32.totalorder %s17, 1
      %p60 = por %p58, %p59
      %p61 = scmp.ne.s32.totalorder %s53, %s56
      %p62 = scmp.eq.s32.totalorder %s17, 0
      %p63 = por %p61, %p62
      %p64 = scmp.ne.s32.totalorder %s53, %s56
      %p65 = scmp.eq.s32.totalorder %s22, 1
      %p66 = por %p64, %p65
      %p67 = scmp.ne.s32.totalorder %s56, %s57
      %p68 = scmp.eq.s32.totalorder %s22, 0
      %p69 = por %p67, %p68
      %p70 = scmp.ne.s32.totalorder %s56, %s57
      %p71 = scmp.eq.s32.totalorder %s23, 1
      %p72 = por %p70, %p71
      %p74 = scmp.ne.s32.totalorder %s57, %s73
      %p75 = scmp.eq.s32.totalorder %s23, 0
      %p76 = por %p74, %p75
      %s78 = sadd.s32 %s77, 1
      %p81 = scmp.eq.s32.totalorder %s17, 1
      %p82 = scmp.ne.s32.totalorder %s77, %s79
      %p83 = scmp.eq.s32.totalorder %s17, 0
      %p84 = por %p82, %p83
      %p85 = scmp.ne.s32.totalorder %s77, %s79
      %p86 = scmp.eq.s32.totalorder %s22, 1
      %p87 = por %p85, %p86
      %p88 = scmp.ne.s32.totalorder %s79, %s80
      %p89 = scmp.eq.s32.totalorder %s22, 0
      %p90 = por %p88, %p89
      %p91 = scmp.ne.s32.totalorder %s79, %s80
      %p92 = scmp.eq.s32.totalorder %s23, 1
      %p93 = por %p91, %p92
      %p95 = scmp.ne.s32.totalorder %s80, %s94
      %p96 = scmp.eq.s32.totalorder %s23, 0
      %p97 = por %p95, %p96
      %s99 = sadd.s32 %s98, 1
      %p102 = scmp.eq.s32.totalorder %s17, 1
      %p103 = scmp.ne.s32.totalorder %s98, %s100
      %p104 = scmp.eq.s32.totalorder %s17, 0
      %p105 = por %p103, %p104
      %p106 = scmp.ne.s32.totalorder %s98, %s100
      %p107 = scmp.eq.s32.totalorder %s22, 1
      %p108 = por %p106, %p107
      %p109 = scmp.ne.s32.totalorder %s100, %s101
      %p110 = scmp.eq.s32.totalorder %s22, 0
      %p111 = por %p109, %p110
      %p112 = scmp.ne.s32.totalorder %s100, %s101
      %p113 = scmp.eq.s32.totalorder %s23, 1
      %p114 = por %p112, %p113
      %p116 = scmp.ne.s32.totalorder %s101, %s115
      %p117 = scmp.eq.s32.totalorder %s23, 0
      %p118 = por %p116, %p117
      %s120 = sadd.s32 %s119, 1
      %p123 = scmp.eq.s32.totalorder %s17, 1
      %p124 = scmp.ne.s32.totalorder %s119, %s121
      %p125 = scmp.eq.s32.totalorder %s17, 0
      %p126 = por %p124, %p125
      %p127 = scmp.ne.s32.totalorder %s119, %s121
      %p128 = scmp.eq.s32.totalorder %s22, 1
      %p129 = por %p127, %p128
      %p130 = scmp.ne.s32.totalorder %s121, %s122
      %p131 = scmp.eq.s32.totalorder %s22, 0
      %p132 = por %p130, %p131
      %p133 = scmp.ne.s32.totalorder %s121, %s122
      %p134 = scmp.eq.s32.totalorder %s23, 1
      %p135 = por %p133, %p134
      %p137 = scmp.ne.s32.totalorder %s122, %s136
      %p138 = scmp.eq.s32.totalorder %s23, 0
      %p139 = por %p137, %p138
      %s141 = sadd.s32 %s140, 1
      %p144 = scmp.eq.s32.totalorder %s17, 1
      %p145 = scmp.ne.s32.totalorder %s140, %s142
      %p146 = scmp.eq.s32.totalorder %s17, 0
      %p147 = por %p145, %p146
      %p148 = scmp.ne.s32.totalorder %s140, %s142
      %p149 = scmp.eq.s32.totalorder %s22, 1
      %p150 = por %p148, %p149
      %p151 = scmp.ne.s32.totalorder %s142, %s143
      %p152 = scmp.eq.s32.totalorder %s22, 0
      %p153 = por %p151, %p152
      %p154 = scmp.ne.s32.totalorder %s142, %s143
      %p155 = scmp.eq.s32.totalorder %s23, 1
      %p156 = por %p154, %p155
      %p158 = scmp.ne.s32.totalorder %s143, %s157
      %p159 = scmp.eq.s32.totalorder %s23, 0
      %p160 = por %p158, %p159
      %s162 = sadd.s32 %s161, 1
      %p165 = scmp.eq.s32.totalorder %s17, 1
      %p166 = scmp.ne.s32.totalorder %s161, %s163
      %p167 = scmp.eq.s32.totalorder %s17, 0
      %p168 = por %p166, %p167
      %p169 = scmp.ne.s32.totalorder %s161, %s163
      %p170 = scmp.eq.s32.totalorder %s22, 1
      %p171 = por %p169, %p170
      %p172 = scmp.ne.s32.totalorder %s163, %s164
      %p173 = scmp.eq.s32.totalorder %s22, 0
      %p174 = por %p172, %p173
      %p175 = scmp.ne.s32.totalorder %s163, %s164
      %p176 = scmp.eq.s32.totalorder %s23, 1
      %p177 = por %p175, %p176
      %p179 = scmp.ne.s32.totalorder %s164, %s178
      %p180 = scmp.eq.s32.totalorder %s23, 0
      %p181 = por %p179, %p180
      %s183 = sadd.s32 %s182, 1
      %p186 = scmp.eq.s32.totalorder %s17, 1
      %p187 = scmp.ne.s32.totalorder %s182, %s184
      %p188 = scmp.eq.s32.totalorder %s17, 0
      %p189 = por %p187, %p188
      %p190 = scmp.ne.s32.totalorder %s182, %s184
      %p191 = scmp.eq.s32.totalorder %s22, 1
      %p192 = por %p190, %p191
      %p193 = scmp.ne.s32.totalorder %s184, %s185
      %p194 = scmp.eq.s32.totalorder %s22, 0
      %p195 = por %p193, %p194
      %p196 = scmp.ne.s32.totalorder %s184, %s185
      %p197 = scmp.eq.s32.totalorder %s23, 1
      %p198 = por %p196, %p197
      %p200 = scmp.ne.s32.totalorder %s185, %s199
      %p201 = scmp.eq.s32.totalorder %s23, 0
      %p202 = por %p200, %p201
      %s203 = ssub.s32 %s17, %s24
      %p204 = scmp.eq.s32.totalorder %s203, 0
      %s206 = sadd.s32 %s205, 1
      %s207 = scalar_select %p204, %s205, %s206
      %p210 = pneg %p204
      %p211 = scmp.eq.s32.totalorder %s17, 1
      %p212 = por %p210, %p211
      %p213 = scmp.ne.s32.totalorder %s205, %s208
      %p214 = scmp.eq.s32.totalorder %s17, 0
      %p215 = por %p213, %p214
      %p216 = scmp.ne.s32.totalorder %s205, %s208
      %p217 = scmp.eq.s32.totalorder %s22, 1
      %p218 = por %p216, %p217
      %p219 = scmp.ne.s32.totalorder %s208, %s209
      %p220 = scmp.eq.s32.totalorder %s22, 0
      %p221 = por %p219, %p220
      %p222 = scmp.ne.s32.totalorder %s208, %s209
      %p223 = scmp.eq.s32.totalorder %s23, 1
      %p224 = por %p222, %p223
      %p226 = scmp.ne.s32.totalorder %s209, %s225
      %p227 = scmp.eq.s32.totalorder %s23, 0
      %p228 = por %p226, %p227
      %p229 = scmp.le.s32.totalorder 1, %s17
      %p230 = scmp.lt.s32.totalorder %s17, 3
      %p231 = pnand %p229, %p230
      %p232 = pneg %p231
      // Predicated region
      $region9: #{tpu_custom_call.1} parent=5 // pred_check
        _
      $region10: #{tpu_custom_call.1} parent=5 // pred_check_branch
        %234 = sbr.rel (%p231) target = $region12
      $region11: #{tpu_custom_call.1} parent=5 // pred_region
        %s235 = ssub.s32 %s17, 1
        // Predicated region
        $region13: #{tpu_custom_call.1} parent=11 // pred_check
          %p236 = pneg %p90
        $region14: #{tpu_custom_call.1} parent=11 // pred_check_branch
          %238 = sbr.rel (%p236) target = $region16
        $region15: #{tpu_custom_call.1} parent=11 // pred_region
          _
        $region16: #{tpu_custom_call.1} parent=11 // pred_fallthru
          _
        // Predicated region
        $region17: #{tpu_custom_call.1} parent=11 // pred_check
          %p239 = pneg %p111
        $region18: #{tpu_custom_call.1} parent=11 // pred_check_branch
          %241 = sbr.rel (%p239) target = $region20
        $region19: #{tpu_custom_call.1} parent=11 // pred_region
          _
        $region20: #{tpu_custom_call.1} parent=11 // pred_fallthru
          _
        // Predicated region
        $region21: #{tpu_custom_call.1} parent=11 // pred_check
          %p242 = pneg %p132
        $region22: #{tpu_custom_call.1} parent=11 // pred_check_branch
          %244 = sbr.rel (%p242) target = $region24
        $region23: #{tpu_custom_call.1} parent=11 // pred_region
          _
        $region24: #{tpu_custom_call.1} parent=11 // pred_fallthru
          _
        // Predicated region
        $region25: #{tpu_custom_call.1} parent=11 // pred_check
          %p245 = pneg %p153
        $region26: #{tpu_custom_call.1} parent=11 // pred_check_branch
          %247 = sbr.rel (%p245) target = $region28
        $region27: #{tpu_custom_call.1} parent=11 // pred_region
          _
        $region28: #{tpu_custom_call.1} parent=11 // pred_fallthru
          _
        // Predicated region
        $region29: #{tpu_custom_call.1} parent=11 // pred_check
          %p248 = pneg %p174
        $region30: #{tpu_custom_call.1} parent=11 // pred_check_branch
          %250 = sbr.rel (%p248) target = $region32
        $region31: #{tpu_custom_call.1} parent=11 // pred_region
          _
        $region32: #{tpu_custom_call.1} parent=11 // pred_fallthru
          _
        // Predicated region
        $region33: #{tpu_custom_call.1} parent=11 // pred_check
          %p251 = pneg %p195
        $region34: #{tpu_custom_call.1} parent=11 // pred_check_branch
          %253 = sbr.rel (%p251) target = $region36
        $region35: #{tpu_custom_call.1} parent=11 // pred_region
          _
        $region36: #{tpu_custom_call.1} parent=11 // pred_fallthru
          _
      $region12: #{tpu_custom_call.1} parent=5 // pred_fallthru
        _
      %p254 = scmp.lt.s32.totalorder %s17, 2
      // Predicated region
      $region37: #{tpu_custom_call.1} parent=5 // pred_check
        %p255 = pneg %p254
      $region38: #{tpu_custom_call.1} parent=5 // pred_check_branch
        %257 = sbr.rel (%p255) target = $region40
      $region39: #{tpu_custom_call.1} parent=5 // pred_region
        // Predicated region
        $region41: #{tpu_custom_call.1} parent=39 // pred_check
          %p258 = pneg %p37
        $region42: #{tpu_custom_call.1} parent=39 // pred_check_branch
          %260 = sbr.rel (%p258) target = $region44
        $region43: #{tpu_custom_call.1} parent=39 // pred_region
          %p261 = scmp.lt.s32.totalorder %s17, 1
          %s262 = scalar_select %p261, %s17, 1
          %s263 = smul.addr %s262, 2
          %s264 = scalar_lea.vmem %s0, %s263
        $region44: #{tpu_custom_call.1} parent=39 // pred_fallthru
          _
        // Predicated region
        $region45: #{tpu_custom_call.1} parent=39 // pred_check
          %p265 = pneg %p63
        $region46: #{tpu_custom_call.1} parent=39 // pred_check_branch
          %267 = sbr.rel (%p265) target = $region48
        $region47: #{tpu_custom_call.1} parent=39 // pred_region
          %s268 = smul.u32 16, %s17
          %p269 = scmp.lt.s32.totalorder %s268, 31
          %s270 = scalar_select %p269, %s268, 31
          %s271 = smul.addr %s270, 8
          %s272 = scalar_lea.vmem %s1, %s271
          %s273 = smul.u32 16, %s17
        $region48: #{tpu_custom_call.1} parent=39 // pred_fallthru
          _
      $region40: #{tpu_custom_call.1} parent=5 // pred_fallthru
        _
      %p274 = scmp.le.s32.totalorder 1, %s17
      %p275 = scmp.lt.s32.totalorder %s17, 3
      %p276 = pnand %p274, %p275
      %p277 = pneg %p276
      // Predicated region
      $region49: #{tpu_custom_call.1} parent=5 // pred_check
        _
      $region50: #{tpu_custom_call.1} parent=5 // pred_check_branch
        %279 = sbr.rel (%p276) target = $region52
      $region51: #{tpu_custom_call.1} parent=5 // pred_region
        %s280 = ssub.s32 %s17, 1
        %p281 = scmp.lt.s32.totalorder %s22, 1
        %s282 = scalar_select %p281, %s22, 1
        %s283 = smul.addr %s282, 2
        %s284 = scalar_lea.vmem %s0, %s283
        %p285 = pneg %p43
        %p286 = pneg %p40
        %s287 = smul.u32 16, %s22
        %p288 = scmp.lt.s32.totalorder %s287, 31
        %s289 = scalar_select %p288, %s287, 31
        %s290 = smul.addr %s289, 8
        %s291 = scalar_lea.vmem %s1, %s290
        %p292 = pneg %p69
        %p293 = pneg %p66
        %p294 = pneg %p90
        %p295 = pneg %p87
        %p296 = pneg %p111
        %p297 = pneg %p108
        %p298 = pneg %p132
        %p299 = pneg %p129
        %p300 = pneg %p153
        %p301 = pneg %p150
        %p302 = pneg %p174
        %p303 = pneg %p171
        %p304 = pneg %p195
        %p305 = pneg %p192
        %p306 = pneg %p221
        %p307 = pneg %p218
        %s308 = sand.u32 %s208, 1
        %s309 = scalar_lea.sflag [#allocation3], %s308
        %s310 = sand.u32 %s208, 1
        %s311 = smul.addr %s310, 8
        %s312 = scalar_lea.vmem [#allocation2], %s311
        %p313 = scmp.lt.s32.totalorder %s22, 1
        %s314 = scalar_select %p313, %s22, 1
        %s315 = smul.addr %s314, 2
        %s316 = scalar_lea.vmem %s0, %s315
        %s317 = smul.u32 16, %s22
        %p318 = scmp.lt.s32.totalorder %s317, 31
        %s319 = scalar_select %p318, %s317, 31
        %s320 = smul.addr %s319, 8
        %s321 = scalar_lea.vmem %s1, %s320
        %s322 = smul.u32 16, %s22
        %v323 = vld [vmem:[%s321] sm:$0xff]
        %v324 = vld [vmem:[%s321 + $0x8] sm:$0xff]
        %v325 = vld [vmem:[%s321 + $0x10] sm:$0xff]
        %v326 = vld [vmem:[%s321 + $0x18] sm:$0xff]
        %v327 = vld [vmem:[%s321 + $0x20] sm:$0xff]
        %v328 = vld [vmem:[%s321 + $0x28] sm:$0xff]
        %v329 = vld [vmem:[%s321 + $0x30] sm:$0xff]
        %v330 = vld [vmem:[%s321 + $0x38] sm:$0xff]
        %v331 = vld [vmem:[%s321 + $0x40] sm:$0xff]
        %v332 = vld [vmem:[%s321 + $0x48] sm:$0xff]
        %v333 = vld [vmem:[%s321 + $0x50] sm:$0xff]
        %v334 = vld [vmem:[%s321 + $0x58] sm:$0xff]
        %v335 = vld [vmem:[%s321 + $0x60] sm:$0xff]
        %v336 = vld [vmem:[%s321 + $0x68] sm:$0xff]
        %v337 = vld [vmem:[%s321 + $0x70] sm:$0xff]
        %v338 = vld [vmem:[%s321 + $0x78] sm:$0xff]
        %v339 = vld [vmem:[%s2] sm:$0xff]
        %v340 = vld [vmem:[%s2 + $0x8] sm:$0xff]
        %v341 = vld [vmem:[%s3] sm:$0x1]
        %v343 = vlaneseq
        %v344 = vshrl.u32 %v343, 7
        %v345 = vsub.s32 0, %v344
        %v346 = vrot.slane %v341, %v345
        %vm348 = vcmask 130048
        %v350 = vsel %vm348, %v323, 0
        %v353 = vsel %vm348, %v324, 0
        %v356 = vsel %vm348, %v325, 0
        %v359 = vsel %vm348, %v326, 0
        %v362 = vsel %vm348, %v327, 0
        %v365 = vsel %vm348, %v328, 0
        %v368 = vsel %vm348, %v329, 0
        %v371 = vsel %vm348, %v330, 0
        %v374 = vsel %vm348, %v331, 0
        %v377 = vsel %vm348, %v332, 0
        %v380 = vsel %vm348, %v333, 0
        %v383 = vsel %vm348, %v334, 0
        %v386 = vsel %vm348, %v335, 0
        %v389 = vsel %vm348, %v336, 0
        %v392 = vsel %vm348, %v337, 0
        %v395 = vsel %vm348, %v338, 0
        %397 = vmatprep.subr.mxu0 0.0
        %398 = vmatpush1.msra.mxu0 0.0
        %399 = vmatprep.subr.mxu0 0.0
        %400 = vmatpush1.msra.mxu0 0.0
        %401 = vmatprep.subr.mxu0 0.0
        %402 = vmatpush1.msra.mxu0 0.0
        %403 = vmatprep.subr.mxu0 0.0
        %404 = vmatpush1.msra.mxu0 0.0
        %405 = vmatprep.subr.mxu0 0.0
        %406 = vmatpush1.msra.mxu0 0.0
        %407 = vmatprep.subr.mxu0 0.0
        %408 = vmatpush1.msra.mxu0 0.0
        %409 = vmatprep.subr.mxu0 0.0
        %410 = vmatpush1.msra.mxu0 0.0
        %411 = vmatprep.subr.mxu0 0.0
        %412 = vmatpush1.msra.mxu0 0.0
        %413 = vmatprep.subr.mxu0 0.0
        %414 = vmatpush1.msra.mxu0 0.0
        %415 = vmatprep.subr.mxu0 0.0
        %416 = vmatpush1.msra.mxu0 0.0
        %417 = vmatprep.subr.mxu0 0.0
        %418 = vmatpush1.msra.mxu0 0.0
        %419 = vmatprep.subr.mxu0 0.0
        %420 = vmatpush1.msra.mxu0 0.0
        %421 = vmatprep.subr.mxu0 0.0
        %422 = vmatpush1.msra.mxu0 0.0
        %423 = vmatprep.subr.mxu0 0.0
        %424 = vmatpush1.msra.mxu0 0.0
        %425 = vmatprep.subr.mxu0 0.0
        %426 = vmatpush1.msra.mxu0 %v340
        %427 = vmatprep.subr.mxu0 0.0
        %428 = vmatpush1.msra.mxu0 %v339
        %429 = vmatprep.subr.mxu0 0.0
        %430 = vmatpush2.msra.mxu0 0.0
        %431 = vmatprep.subr.mxu0 0.0
        %432 = vmatpush2.msra.mxu0 0.0
        %433 = vmatprep.subr.mxu0 0.0
        %434 = vmatpush2.msra.mxu0 0.0
        %435 = vmatprep.subr.mxu0 0.0
        %436 = vmatpush2.msra.mxu0 0.0
        %437 = vmatprep.subr.mxu0 0.0
        %438 = vmatpush2.msra.mxu0 0.0
        %439 = vmatprep.subr.mxu0 0.0
        %440 = vmatpush2.msra.mxu0 0.0
        %441 = vmatprep.subr.mxu0 0.0
        %442 = vmatpush2.msra.mxu0 0.0
        %443 = vmatprep.subr.mxu0 0.0
        %444 = vmatpush2.msra.mxu0 0.0
        %445 = vmatprep.subr.mxu0 0.0
        %446 = vmatpush2.msra.mxu0 0.0
        %447 = vmatprep.subr.mxu0 0.0
        %448 = vmatpush2.msra.mxu0 0.0
        %449 = vmatprep.subr.mxu0 0.0
        %450 = vmatpush2.msra.mxu0 0.0
        %451 = vmatprep.subr.mxu0 0.0
        %452 = vmatpush2.msra.mxu0 0.0
        %453 = vmatprep.subr.mxu0 0.0
        %454 = vmatpush2.msra.mxu0 0.0
        %455 = vmatprep.subr.mxu0 0.0
        %456 = vmatpush2.msra.mxu0 0.0
        %457 = vmatprep.subr.mxu0 0.0
        %458 = vmatpush2.msra.mxu0 0.0
        %459 = vmatprep.subr.mxu0 0.0
        %460 = vmatpush2.msra.mxu0 0.0
        %461 = vmatprep.mubr.f32.mxu0 0.0
        %462 = vmatmul.mubr.f32.gmra.mxu0 %v350
        %v463 = vpop.f32.mrf.mxu0
        %v464 = vadd.f32 %v346, %v463
        %v465 = vpop.f32.mrf.mxu0
        %466 = vmatprep.mubr.f32.mxu0 0.0
        %467 = vmatmul.mubr.f32.gmra.mxu0 %v353
        %v468 = vpop.f32.mrf.mxu0
        %v469 = vadd.f32 %v346, %v468
        %v470 = vpop.f32.mrf.mxu0
        %471 = vmatprep.mubr.f32.mxu0 0.0
        %472 = vmatmul.mubr.f32.gmra.mxu0 %v356
        %v473 = vpop.f32.mrf.mxu0
        %v474 = vadd.f32 %v346, %v473
        %v475 = vpop.f32.mrf.mxu0
        %476 = vmatprep.mubr.f32.mxu0 0.0
        %477 = vmatmul.mubr.f32.gmra.mxu0 %v359
        %v478 = vpop.f32.mrf.mxu0
        %v479 = vadd.f32 %v346, %v478
        %v480 = vpop.f32.mrf.mxu0
        %481 = vmatprep.mubr.f32.mxu0 0.0
        %482 = vmatmul.mubr.f32.gmra.mxu0 %v362
        %v483 = vpop.f32.mrf.mxu0
        %v484 = vadd.f32 %v346, %v483
        %v485 = vpop.f32.mrf.mxu0
        %486 = vmatprep.mubr.f32.mxu0 0.0
        %487 = vmatmul.mubr.f32.gmra.mxu0 %v365
        %v488 = vpop.f32.mrf.mxu0
        %v489 = vadd.f32 %v346, %v488
        %v490 = vpop.f32.mrf.mxu0
        %491 = vmatprep.mubr.f32.mxu0 0.0
        %492 = vmatmul.mubr.f32.gmra.mxu0 %v368
        %v493 = vpop.f32.mrf.mxu0
        %v494 = vadd.f32 %v346, %v493
        %v495 = vpop.f32.mrf.mxu0
        %496 = vmatprep.mubr.f32.mxu0 0.0
        %497 = vmatmul.mubr.f32.gmra.mxu0 %v371
        %v498 = vpop.f32.mrf.mxu0
        %v499 = vadd.f32 %v346, %v498
        %v500 = vpop.f32.mrf.mxu0
        %501 = vmatprep.mubr.f32.mxu0 0.0
        %502 = vmatmul.mubr.f32.gmra.mxu0 %v374
        %v503 = vpop.f32.mrf.mxu0
        %v504 = vadd.f32 %v346, %v503
        %v505 = vpop.f32.mrf.mxu0
        %506 = vmatprep.mubr.f32.mxu0 0.0
        %507 = vmatmul.mubr.f32.gmra.mxu0 %v377
        %v508 = vpop.f32.mrf.mxu0
        %v509 = vadd.f32 %v346, %v508
        %v510 = vpop.f32.mrf.mxu0
        %511 = vmatprep.mubr.f32.mxu0 0.0
        %512 = vmatmul.mubr.f32.gmra.mxu0 %v380
        %v513 = vpop.f32.mrf.mxu0
        %v514 = vadd.f32 %v346, %v513
        %v515 = vpop.f32.mrf.mxu0
        %516 = vmatprep.mubr.f32.mxu0 0.0
        %517 = vmatmul.mubr.f32.gmra.mxu0 %v383
        %v518 = vpop.f32.mrf.mxu0
        %v519 = vadd.f32 %v346, %v518
        %v520 = vpop.f32.mrf.mxu0
        %521 = vmatprep.mubr.f32.mxu0 0.0
        %522 = vmatmul.mubr.f32.gmra.mxu0 %v386
        %v523 = vpop.f32.mrf.mxu0
        %v524 = vadd.f32 %v346, %v523
        %v525 = vpop.f32.mrf.mxu0
        %526 = vmatprep.mubr.f32.mxu0 0.0
        %527 = vmatmul.mubr.f32.gmra.mxu0 %v389
        %v528 = vpop.f32.mrf.mxu0
        %v529 = vadd.f32 %v346, %v528
        %v530 = vpop.f32.mrf.mxu0
        %531 = vmatprep.mubr.f32.mxu0 0.0
        %532 = vmatmul.mubr.f32.gmra.mxu0 %v392
        %v533 = vpop.f32.mrf.mxu0
        %v534 = vadd.f32 %v346, %v533
        %v535 = vpop.f32.mrf.mxu0
        %536 = vmatprep.mubr.f32.mxu0 0.0
        %537 = vmatmul.mubr.f32.gmra.mxu0 %v395
        %v538 = vpop.f32.mrf.mxu0
        %v539 = vadd.f32 %v346, %v538
        %v540 = vpop.f32.mrf.mxu0
        %541 = vdwg.mxu0
        %vm542 = vcmp.gt.f32.partialorder %v464, 0.0
        %vm543 = vcmp.gt.f32.partialorder %v469, 0.0
        %vm544 = vcmp.gt.f32.partialorder %v474, 0.0
        %vm545 = vcmp.gt.f32.partialorder %v479, 0.0
        %vm546 = vcmp.gt.f32.partialorder %v484, 0.0
        %vm547 = vcmp.gt.f32.partialorder %v489, 0.0
        %vm548 = vcmp.gt.f32.partialorder %v494, 0.0
        %vm549 = vcmp.gt.f32.partialorder %v499, 0.0
        %vm550 = vcmp.gt.f32.partialorder %v504, 0.0
        %vm551 = vcmp.gt.f32.partialorder %v509, 0.0
        %vm552 = vcmp.gt.f32.partialorder %v514, 0.0
        %vm553 = vcmp.gt.f32.partialorder %v519, 0.0
        %vm554 = vcmp.gt.f32.partialorder %v524, 0.0
        %vm555 = vcmp.gt.f32.partialorder %v529, 0.0
        %vm556 = vcmp.gt.f32.partialorder %v534, 0.0
        %vm557 = vcmp.gt.f32.partialorder %v539, 0.0
        %v558 = vmul.f32 %v464, 0.01
        %v559 = vmul.f32 %v469, 0.01
        %v560 = vmul.f32 %v474, 0.01
        %v561 = vmul.f32 %v479, 0.01
        %v562 = vmul.f32 %v484, 0.01
        %v563 = vmul.f32 %v489, 0.01
        %v564 = vmul.f32 %v494, 0.01
        %v565 = vmul.f32 %v499, 0.01
        %v566 = vmul.f32 %v504, 0.01
        %v567 = vmul.f32 %v509, 0.01
        %v568 = vmul.f32 %v514, 0.01
        %v569 = vmul.f32 %v519, 0.01
        %v570 = vmul.f32 %v524, 0.01
        %v571 = vmul.f32 %v529, 0.01
        %v572 = vmul.f32 %v534, 0.01
        %v573 = vmul.f32 %v539, 0.01
        %v574 = vsel %vm542, %v464, %v558
        %v575 = vsel %vm543, %v469, %v559
        %v576 = vsel %vm544, %v474, %v560
        %v577 = vsel %vm545, %v479, %v561
        %v578 = vsel %vm546, %v484, %v562
        %v579 = vsel %vm547, %v489, %v563
        %v580 = vsel %vm548, %v494, %v564
        %v581 = vsel %vm549, %v499, %v565
        %v582 = vsel %vm550, %v504, %v566
        %v583 = vsel %vm551, %v509, %v567
        %v584 = vsel %vm552, %v514, %v568
        %v585 = vsel %vm553, %v519, %v569
        %v586 = vsel %vm554, %v524, %v570
        %v587 = vsel %vm555, %v529, %v571
        %v588 = vsel %vm556, %v534, %v572
        %v589 = vsel %vm557, %v539, %v573
        %v590 = vld [vmem:[%s4] sm:$0xff]
        %v591 = vld [vmem:[%s4 + $0x8] sm:$0xff]
        %v592 = vld [vmem:[%s4 + $0x10] sm:$0xff]
        %v593 = vld [vmem:[%s4 + $0x18] sm:$0xff]
        %v594 = vld [vmem:[%s5] sm:$0x1]
        %v596 = vlaneseq
        %v597 = vshrl.u32 %v596, 7
        %v598 = vsub.s32 0, %v597
        %v599 = vrot.slane %v594, %v598
        %vm601 = vcmask 261120
        %v603 = vsel %vm601, %v574, 0
        %v606 = vsel %vm601, %v575, 0
        %v609 = vsel %vm601, %v576, 0
        %v612 = vsel %vm601, %v577, 0
        %v615 = vsel %vm601, %v578, 0
        %v618 = vsel %vm601, %v579, 0
        %v621 = vsel %vm601, %v580, 0
        %v624 = vsel %vm601, %v581, 0
        %v627 = vsel %vm601, %v582, 0
        %v630 = vsel %vm601, %v583, 0
        %v633 = vsel %vm601, %v584, 0
        %v636 = vsel %vm601, %v585, 0
        %v639 = vsel %vm601, %v586, 0
        %v642 = vsel %vm601, %v587, 0
        %v645 = vsel %vm601, %v588, 0
        %v648 = vsel %vm601, %v589, 0
        %650 = vmatprep.subr.mxu0 0.0
        %651 = vmatpush1.msra.mxu0 0.0
        %652 = vmatprep.subr.mxu0 0.0
        %653 = vmatpush1.msra.mxu0 0.0
        %654 = vmatprep.subr.mxu0 0.0
        %655 = vmatpush1.msra.mxu0 0.0
        %656 = vmatprep.subr.mxu0 0.0
        %657 = vmatpush1.msra.mxu0 0.0
        %658 = vmatprep.subr.mxu0 0.0
        %659 = vmatpush1.msra.mxu0 0.0
        %660 = vmatprep.subr.mxu0 0.0
        %661 = vmatpush1.msra.mxu0 0.0
        %662 = vmatprep.subr.mxu0 0.0
        %663 = vmatpush1.msra.mxu0 0.0
        %664 = vmatprep.subr.mxu0 0.0
        %665 = vmatpush1.msra.mxu0 0.0
        %666 = vmatprep.subr.mxu0 0.0
        %667 = vmatpush1.msra.mxu0 0.0
        %668 = vmatprep.subr.mxu0 0.0
        %669 = vmatpush1.msra.mxu0 0.0
        %670 = vmatprep.subr.mxu0 0.0
        %671 = vmatpush1.msra.mxu0 0.0
        %672 = vmatprep.subr.mxu0 0.0
        %673 = vmatpush1.msra.mxu0 0.0
        %674 = vmatprep.subr.mxu0 0.0
        %675 = vmatpush1.msra.mxu0 %v593
        %676 = vmatprep.subr.mxu0 0.0
        %677 = vmatpush1.msra.mxu0 %v592
        %678 = vmatprep.subr.mxu0 0.0
        %679 = vmatpush1.msra.mxu0 %v591
        %680 = vmatprep.subr.mxu0 0.0
        %681 = vmatpush1.msra.mxu0 %v590
        %682 = vmatprep.subr.mxu0 0.0
        %683 = vmatpush2.msra.mxu0 0.0
        %684 = vmatprep.subr.mxu0 0.0
        %685 = vmatpush2.msra.mxu0 0.0
        %686 = vmatprep.subr.mxu0 0.0
        %687 = vmatpush2.msra.mxu0 0.0
        %688 = vmatprep.subr.mxu0 0.0
        %689 = vmatpush2.msra.mxu0 0.0
        %690 = vmatprep.subr.mxu0 0.0
        %691 = vmatpush2.msra.mxu0 0.0
        %692 = vmatprep.subr.mxu0 0.0
        %693 = vmatpush2.msra.mxu0 0.0
        %694 = vmatprep.subr.mxu0 0.0
        %695 = vmatpush2.msra.mxu0 0.0
        %696 = vmatprep.subr.mxu0 0.0
        %697 = vmatpush2.msra.mxu0 0.0
        %698 = vmatprep.subr.mxu0 0.0
        %699 = vmatpush2.msra.mxu0 0.0
        %700 = vmatprep.subr.mxu0 0.0
        %701 = vmatpush2.msra.mxu0 0.0
        %702 = vmatprep.subr.mxu0 0.0
        %703 = vmatpush2.msra.mxu0 0.0
        %704 = vmatprep.subr.mxu0 0.0
        %705 = vmatpush2.msra.mxu0 0.0
        %706 = vmatprep.subr.mxu0 0.0
        %707 = vmatpush2.msra.mxu0 0.0
        %708 = vmatprep.subr.mxu0 0.0
        %709 = vmatpush2.msra.mxu0 0.0
        %710 = vmatprep.subr.mxu0 0.0
        %711 = vmatpush2.msra.mxu0 0.0
        %712 = vmatprep.subr.mxu0 0.0
        %713 = vmatpush2.msra.mxu0 0.0
        %714 = vmatprep.mubr.f32.mxu0 0.0
        %715 = vmatmul.mubr.f32.gmra.mxu0 %v603
        %v716 = vpop.f32.mrf.mxu0
        %v717 = vadd.f32 %v599, %v716
        %v718 = vpop.f32.mrf.mxu0
        %719 = vmatprep.mubr.f32.mxu0 0.0
        %720 = vmatmul.mubr.f32.gmra.mxu0 %v606
        %v721 = vpop.f32.mrf.mxu0
        %v722 = vadd.f32 %v599, %v721
        %v723 = vpop.f32.mrf.mxu0
        %724 = vmatprep.mubr.f32.mxu0 0.0
        %725 = vmatmul.mubr.f32.gmra.mxu0 %v609
        %v726 = vpop.f32.mrf.mxu0
        %v727 = vadd.f32 %v599, %v726
        %v728 = vpop.f32.mrf.mxu0
        %729 = vmatprep.mubr.f32.mxu0 0.0
        %730 = vmatmul.mubr.f32.gmra.mxu0 %v612
        %v731 = vpop.f32.mrf.mxu0
        %v732 = vadd.f32 %v599, %v731
        %v733 = vpop.f32.mrf.mxu0
        %734 = vmatprep.mubr.f32.mxu0 0.0
        %735 = vmatmul.mubr.f32.gmra.mxu0 %v615
        %v736 = vpop.f32.mrf.mxu0
        %v737 = vadd.f32 %v599, %v736
        %v738 = vpop.f32.mrf.mxu0
        %739 = vmatprep.mubr.f32.mxu0 0.0
        %740 = vmatmul.mubr.f32.gmra.mxu0 %v618
        %v741 = vpop.f32.mrf.mxu0
        %v742 = vadd.f32 %v599, %v741
        %v743 = vpop.f32.mrf.mxu0
        %744 = vmatprep.mubr.f32.mxu0 0.0
        %745 = vmatmul.mubr.f32.gmra.mxu0 %v621
        %v746 = vpop.f32.mrf.mxu0
        %v747 = vadd.f32 %v599, %v746
        %v748 = vpop.f32.mrf.mxu0
        %749 = vmatprep.mubr.f32.mxu0 0.0
        %750 = vmatmul.mubr.f32.gmra.mxu0 %v624
        %v751 = vpop.f32.mrf.mxu0
        %v752 = vadd.f32 %v599, %v751
        %v753 = vpop.f32.mrf.mxu0
        %754 = vmatprep.mubr.f32.mxu0 0.0
        %755 = vmatmul.mubr.f32.gmra.mxu0 %v627
        %v756 = vpop.f32.mrf.mxu0
        %v757 = vadd.f32 %v599, %v756
        %v758 = vpop.f32.mrf.mxu0
        %759 = vmatprep.mubr.f32.mxu0 0.0
        %760 = vmatmul.mubr.f32.gmra.mxu0 %v630
        %v761 = vpop.f32.mrf.mxu0
        %v762 = vadd.f32 %v599, %v761
        %v763 = vpop.f32.mrf.mxu0
        %764 = vmatprep.mubr.f32.mxu0 0.0
        %765 = vmatmul.mubr.f32.gmra.mxu0 %v633
        %v766 = vpop.f32.mrf.mxu0
        %v767 = vadd.f32 %v599, %v766
        %v768 = vpop.f32.mrf.mxu0
        %769 = vmatprep.mubr.f32.mxu0 0.0
        %770 = vmatmul.mubr.f32.gmra.mxu0 %v636
        %v771 = vpop.f32.mrf.mxu0
        %v772 = vadd.f32 %v599, %v771
        %v773 = vpop.f32.mrf.mxu0
        %774 = vmatprep.mubr.f32.mxu0 0.0
        %775 = vmatmul.mubr.f32.gmra.mxu0 %v639
        %v776 = vpop.f32.mrf.mxu0
        %v777 = vadd.f32 %v599, %v776
        %v778 = vpop.f32.mrf.mxu0
        %779 = vmatprep.mubr.f32.mxu0 0.0
        %780 = vmatmul.mubr.f32.gmra.mxu0 %v642
        %v781 = vpop.f32.mrf.mxu0
        %v782 = vadd.f32 %v599, %v781
        %v783 = vpop.f32.mrf.mxu0
        %784 = vmatprep.mubr.f32.mxu0 0.0
        %785 = vmatmul.mubr.f32.gmra.mxu0 %v645
        %v786 = vpop.f32.mrf.mxu0
        %v787 = vadd.f32 %v599, %v786
        %v788 = vpop.f32.mrf.mxu0
        %789 = vmatprep.mubr.f32.mxu0 0.0
        %790 = vmatmul.mubr.f32.gmra.mxu0 %v648
        %v791 = vpop.f32.mrf.mxu0
        %v792 = vadd.f32 %v599, %v791
        %v793 = vpop.f32.mrf.mxu0
        %794 = vdwg.mxu0
        %vm795 = vcmp.gt.f32.partialorder %v717, 0.0
        %vm796 = vcmp.gt.f32.partialorder %v722, 0.0
        %vm797 = vcmp.gt.f32.partialorder %v727, 0.0
        %vm798 = vcmp.gt.f32.partialorder %v732, 0.0
        %vm799 = vcmp.gt.f32.partialorder %v737, 0.0
        %vm800 = vcmp.gt.f32.partialorder %v742, 0.0
        %vm801 = vcmp.gt.f32.partialorder %v747, 0.0
        %vm802 = vcmp.gt.f32.partialorder %v752, 0.0
        %vm803 = vcmp.gt.f32.partialorder %v757, 0.0
        %vm804 = vcmp.gt.f32.partialorder %v762, 0.0
        %vm805 = vcmp.gt.f32.partialorder %v767, 0.0
        %vm806 = vcmp.gt.f32.partialorder %v772, 0.0
        %vm807 = vcmp.gt.f32.partialorder %v777, 0.0
        %vm808 = vcmp.gt.f32.partialorder %v782, 0.0
        %vm809 = vcmp.gt.f32.partialorder %v787, 0.0
        %vm810 = vcmp.gt.f32.partialorder %v792, 0.0
        %v811 = vmul.f32 %v717, 0.01
        %v812 = vmul.f32 %v722, 0.01
        %v813 = vmul.f32 %v727, 0.01
        %v814 = vmul.f32 %v732, 0.01
        %v815 = vmul.f32 %v737, 0.01
        %v816 = vmul.f32 %v742, 0.01
        %v817 = vmul.f32 %v747, 0.01
        %v818 = vmul.f32 %v752, 0.01
        %v819 = vmul.f32 %v757, 0.01
        %v820 = vmul.f32 %v762, 0.01
        %v821 = vmul.f32 %v767, 0.01
        %v822 = vmul.f32 %v772, 0.01
        %v823 = vmul.f32 %v777, 0.01
        %v824 = vmul.f32 %v782, 0.01
        %v825 = vmul.f32 %v787, 0.01
        %v826 = vmul.f32 %v792, 0.01
        %v827 = vsel %vm795, %v717, %v811
        %v828 = vsel %vm796, %v722, %v812
        %v829 = vsel %vm797, %v727, %v813
        %v830 = vsel %vm798, %v732, %v814
        %v831 = vsel %vm799, %v737, %v815
        %v832 = vsel %vm800, %v742, %v816
        %v833 = vsel %vm801, %v747, %v817
        %v834 = vsel %vm802, %v752, %v818
        %v835 = vsel %vm803, %v757, %v819
        %v836 = vsel %vm804, %v762, %v820
        %v837 = vsel %vm805, %v767, %v821
        %v838 = vsel %vm806, %v772, %v822
        %v839 = vsel %vm807, %v777, %v823
        %v840 = vsel %vm808, %v782, %v824
        %v841 = vsel %vm809, %v787, %v825
        %v842 = vsel %vm810, %v792, %v826
        %v843 = vld [vmem:[%s6] sm:$0xff]
        %v844 = vld [vmem:[%s7] sm:$0xff]
        %846 = vset.pattern.permute.xlu0 0
        %847 = vperm.xlu0 %846, %v844
        %v848 = vpop.permute.xlu0 %847
        %v851 = vsel %vm601, %v843, 0
        %v854 = vsel %vm601, %v827, 0
        %v857 = vsel %vm601, %v828, 0
        %v860 = vsel %vm601, %v829, 0
        %v863 = vsel %vm601, %v830, 0
        %v866 = vsel %vm601, %v831, 0
        %v869 = vsel %vm601, %v832, 0
        %v872 = vsel %vm601, %v833, 0
        %v875 = vsel %vm601, %v834, 0
        %v878 = vsel %vm601, %v835, 0
        %v881 = vsel %vm601, %v836, 0
        %v884 = vsel %vm601, %v837, 0
        %v887 = vsel %vm601, %v838, 0
        %v890 = vsel %vm601, %v839, 0
        %v893 = vsel %vm601, %v840, 0
        %v896 = vsel %vm601, %v841, 0
        %v899 = vsel %vm601, %v842, 0
        %901 = vmatprep.subr.mxu0 0.0
        %902 = vmatpush1.xpose.msra.mxu0 %v899
        %903 = vmatprep.subr.mxu0 0.0
        %904 = vmatpush1.xpose.msra.mxu0 %v896
        %905 = vmatprep.subr.mxu0 0.0
        %906 = vmatpush1.xpose.msra.mxu0 %v893
        %907 = vmatprep.subr.mxu0 0.0
        %908 = vmatpush1.xpose.msra.mxu0 %v890
        %909 = vmatprep.subr.mxu0 0.0
        %910 = vmatpush1.xpose.msra.mxu0 %v887
        %911 = vmatprep.subr.mxu0 0.0
        %912 = vmatpush1.xpose.msra.mxu0 %v884
        %913 = vmatprep.subr.mxu0 0.0
        %914 = vmatpush1.xpose.msra.mxu0 %v881
        %915 = vmatprep.subr.mxu0 0.0
        %916 = vmatpush1.xpose.msra.mxu0 %v878
        %917 = vmatprep.subr.mxu0 0.0
        %918 = vmatpush1.xpose.msra.mxu0 %v875
        %919 = vmatprep.subr.mxu0 0.0
        %920 = vmatpush1.xpose.msra.mxu0 %v872
        %921 = vmatprep.subr.mxu0 0.0
        %922 = vmatpush1.xpose.msra.mxu0 %v869
        %923 = vmatprep.subr.mxu0 0.0
        %924 = vmatpush1.xpose.msra.mxu0 %v866
        %925 = vmatprep.subr.mxu0 0.0
        %926 = vmatpush1.xpose.msra.mxu0 %v863
        %927 = vmatprep.subr.mxu0 0.0
        %928 = vmatpush1.xpose.msra.mxu0 %v860
        %929 = vmatprep.subr.mxu0 0.0
        %930 = vmatpush1.xpose.msra.mxu0 %v857
        %931 = vmatprep.subr.mxu0 0.0
        %932 = vmatpush1.xpose.msra.mxu0 %v854
        %933 = vmatprep.subr.mxu0 0.0
        %934 = vmatpush2.xpose.msra.mxu0 0.0
        %935 = vmatprep.subr.mxu0 0.0
        %936 = vmatpush2.xpose.msra.mxu0 0.0
        %937 = vmatprep.subr.mxu0 0.0
        %938 = vmatpush2.xpose.msra.mxu0 0.0
        %939 = vmatprep.subr.mxu0 0.0
        %940 = vmatpush2.xpose.msra.mxu0 0.0
        %941 = vmatprep.subr.mxu0 0.0
        %942 = vmatpush2.xpose.msra.mxu0 0.0
        %943 = vmatprep.subr.mxu0 0.0
        %944 = vmatpush2.xpose.msra.mxu0 0.0
        %945 = vmatprep.subr.mxu0 0.0
        %946 = vmatpush2.xpose.msra.mxu0 0.0
        %947 = vmatprep.subr.mxu0 0.0
        %948 = vmatpush2.xpose.msra.mxu0 0.0
        %949 = vmatprep.subr.mxu0 0.0
        %950 = vmatpush2.xpose.msra.mxu0 0.0
        %951 = vmatprep.subr.mxu0 0.0
        %952 = vmatpush2.xpose.msra.mxu0 0.0
        %953 = vmatprep.subr.mxu0 0.0
        %954 = vmatpush2.xpose.msra.mxu0 0.0
        %955 = vmatprep.subr.mxu0 0.0
        %956 = vmatpush2.xpose.msra.mxu0 0.0
        %957 = vmatprep.subr.mxu0 0.0
        %958 = vmatpush2.xpose.msra.mxu0 0.0
        %959 = vmatprep.subr.mxu0 0.0
        %960 = vmatpush2.xpose.msra.mxu0 0.0
        %961 = vmatprep.subr.mxu0 0.0
        %962 = vmatpush2.xpose.msra.mxu0 0.0
        %963 = vmatprep.subr.mxu0 0.0
        %964 = vmatpush2.xpose.msra.mxu0 0.0
        %965 = vmatprep.mubr.f32.mxu0 0.0
        %966 = vmatmul.mubr.f32.gmra.mxu0 %v851
        %v967 = vpop.f32.mrf.mxu0
        %v968 = vadd.f32 %v848, %v967
        %v969 = vpop.f32.mrf.mxu0
        %970 = vdwg.mxu0
        %v971 = vmax.f32 %v968, 0.0
        %vm972 = vcmp.ne.f32.partialorder %v968, %v968
        %v973 = vadd.f32 %v968, 0.0
        %v974 = vand.u32 2147483647, %v968
        %v975 = vsub.f32 0.0, %v974
        %v976 = vmul.f32 %v975, 1.442695
        %v977 = vpow.pop %v976
        %v978 = vadd.f32 %v977, 1.0
        %v979 = vlog2.pop %v978
        %v980 = vmul.f32 %v979, 0.6931472
        %v981 = vmul.f32 -0.5, %v977
        %v982 = vadd.f32 %v981, 1.0
        %v983 = vmul.f32 %v982, %v977
        %v984 = vand.u32 2147483647, %v977
        %vm985 = vcmp.lt.f32.partialorder %v984, 0.0004427343
        %v986 = vsel %vm985, %v983, %v980
        %v987 = vadd.f32 %v971, %v986
        %v988 = vsel %vm972, %v973, %v987
        %v989 = vxor.u32 %v968, 2147483648
        %v990 = vmul.f32 %v989, 1.442695
        %v991 = vpow.pop %v990
        %v992 = vadd.f32 %v991, 1.0
        %v993 = vrcp.pop %v992
        %v994 = vmul.f32 1.0, %v993
        %v995 = vld [vmem:[%s316] sm:$0x3]
        %v996 = vsub.f32 0.0, %v988
        %v997 = vmul.f32 %v996, 1.442695
        %v998 = vpow.pop %v997
        %v999 = vsub.f32 %v995, %v968
        %v1001 = vrot.slane %v998, 2
        %v1003 = vmul.f32 %v999, %v1001
        %v1004 = vrot.slane %v998, 1
        %v1006 = vmul.f32 %v999, %v1004
        %v1007 = vmul.f32 %v988, 2.0
        %v1008 = vmul.f32 %v1003, %v1003
        %v1009 = vmul.f32 %v1006, %v1006
        %v1011 = vrot.slane %v1009, 1
        %v1013 = vadd.f32 %v1008, %v1011
        %v1014 = vmul.f32 %v1013, 0.5
        %v1016 = vrot.slane %v1014, 6
        %v1018 = vadd.f32 %v1007, %v1016
        %v1019 = vsub.f32 -1.837877, %v1018
        %v1020 = vmul.f32 %v1019, 1.442695
        %v1021 = vpow.pop %v1020
        %v1022 = vmul.f32 %v995, %v995
        %v1024 = vrot.slane %v1022, 1
        %v1026 = vadd.f32 %v1022, %v1024
        %vm1027 = vcmp.gt.f32.partialorder %v1026, 1.0
        %v1028 = vsel %vm1027, 0.0, 0.31830987
        %v1030 = vrot.slane %v994, 2
        %v1032 = vmul.f32 %v1021, %v1030
        %v1033 = vsub.f32 1.0, %v994
        %v1035 = vrot.slane %v1033, 4
        %v1037 = vmul.f32 %v1028, %v1035
        %v1039 = vrot.slane %v1037, 6
        %v1041 = vadd.f32 %v1032, %v1039
        %v1042 = vadd.f32 %v1041, 1e-05
        %v1043 = vlog2.pop %v1042
        %v1044 = vmul.f32 %v1043, 0.6931472
        %v1045 = vlaneseq
        %v1046 = vshrl.u32 %v1045, 7
        %vm1047 = vcmp.lt.s32.totalorder %v1046, 2
        %v1048 = vsel %vm1047, %v968, 0.0
        %vm1049 = vcmp.eq.s32.totalorder %v1046, 2
        %v1050 = vlaneseq
        %v1051 = vshrl.u32 %v1050, 7
        %v1052 = vsub.s32 2, %v1051
        %v1053 = vrot.slane %v988, %v1052
        %v1054 = vsel %vm1049, %v1053, 0.0
        %v1055 = vadd.f32 %v1048, %v1054
        %vm1056 = vcmp.eq.s32.totalorder %v1046, 3
        %v1057 = vlaneseq
        %v1058 = vshrl.u32 %v1057, 7
        %v1059 = vsub.s32 4, %v1058
        %v1060 = vrot.slane %v994, %v1059
        %v1061 = vsel %vm1056, %v1060, 0.0
        %v1062 = vadd.f32 %v1055, %v1061
        %vm1063 = vcmp.eq.s32.totalorder %v1046, 4
        %v1064 = vlaneseq
        %v1065 = vshrl.u32 %v1064, 7
        %v1066 = vsub.s32 2, %v1065
        %v1067 = vrot.slane %v1044, %v1066
        %v1068 = vsel %vm1063, %v1067, 0.0
        %v1069 = vadd.f32 %v1062, %v1068
        %1070 = vst [vmem:[%s312] sm:$0xff] %v1069
        %s1071 = sand.u32 %s208, 1
        %s1072 = scalar_lea.sflag [#allocation3], %s1071
        %s1073 = sand.u32 %s208, 1
        %s1074 = smul.addr %s1073, 8
        %s1075 = scalar_lea.vmem [#allocation2], %s1074
        // Predicated region
        $region53: #{tpu_custom_call.1} parent=51 // pred_check
          %p1076 = pneg %p218
        $region54: #{tpu_custom_call.1} parent=51 // pred_check_branch
          %1078 = sbr.rel (%p1076) target = $region56
        $region55: #{tpu_custom_call.1} parent=51 // pred_region
          %s1080 = ssub.s32 128, 128
          %1081 = vsyncadd %s1072, %s1080
          %s1082 = smul.addr %s22, 128
          %s1083 = scalar_lea.hbm %s8, %s1082
          %s1085 = sshll.u32 %s1075, 4
          %s1086 = int_to_ptr.vmem [resolvable:$true] %s1085
          %1088 = dma.vmem_to_hbm [thread:$0]  %s1086, 128, %s1083, %s1072
        $region56: #{tpu_custom_call.1} parent=51 // pred_fallthru
          _
      $region52: #{tpu_custom_call.1} parent=5 // pred_fallthru
        _
      %p1089 = scmp.le.s32.totalorder 2, %s17
      // Predicated region
      $region57: #{tpu_custom_call.1} parent=5 // pred_check
        %p1090 = pneg %p1089
      $region58: #{tpu_custom_call.1} parent=5 // pred_check_branch
        %1092 = sbr.rel (%p1090) target = $region60
      $region59: #{tpu_custom_call.1} parent=5 // pred_region
        %s1093 = ssub.s32 %s17, 2
        // Predicated region
        $region61: #{tpu_custom_call.1} parent=59 // pred_check
          %p1094 = pneg %p224
        $region62: #{tpu_custom_call.1} parent=59 // pred_check_branch
          %1096 = sbr.rel (%p1094) target = $region64
        $region63: #{tpu_custom_call.1} parent=59 // pred_region
          %s1097 = sand.u32 %s209, 1
          %s1098 = scalar_lea.sflag [#allocation3], %s1097
          %s1099 = sand.u32 %s209, 1
          %s1100 = smul.addr %s1099, 8
          %s1101 = scalar_lea.vmem [#allocation2], %s1100
          %1102 = dma.done %s1098, 128
        $region64: #{tpu_custom_call.1} parent=59 // pred_fallthru
          _
      $region60: #{tpu_custom_call.1} parent=5 // pred_fallthru
        _
    $region6: #{tpu_custom_call.1} parent=1 // loop_footer
      %s21 = sadd.s32 1, %s17
    $region7: #{tpu_custom_call.1} parent=1 // loop_footer_branch
      %16 = sbr.rel target = $region3
    $region8: #{tpu_custom_call.1} parent=1 // loop_exit
      _
    %1103 = vsyncpa [#allocation3], 1
    %s1104 = scalar_lea.sflag [#allocation3], 1
    %1105 = vsyncpa %s1104, 1

</llo_original>
